<compile_context>
chip_gen: v6e
topology: v6e:2x2x1
jax: 0.10.0
libtpu: 0.0.40
codegen_flags: <defaults>
</compile_context>

<pallas_src>
import functools

import jax
import jax.numpy as jnp
from jax import lax
from jax.experimental import pallas as pl
from jax.experimental.pallas import tpu as pltpu

LN_EPS = 1e-12


def _bert_emb_kernel(w_ref,      # (1, TS, H) pre-gathered word-embedding rows
                     pos_ref,    # (TS, H)    contiguous position-embedding rows
                     ttbl_ref,   # (T, H)     full token-type table (VMEM resident)
                     tt_ref,     # (1, TS, 1) int32 token-type ids
                     g_ref,      # (1, H)     LayerNorm gamma
                     b_ref,      # (1, H)     LayerNorm beta
                     o_ref,      # (1, TS, H) output block (aliases w_ref's HBM)
                     *, num_types, hidden):
    w = w_ref[0]                     # (TS, H)
    p = pos_ref[...]                 # (TS, H)
    ttbl = ttbl_ref[...]             # (T, H)
    tt = tt_ref[0]                   # (TS, 1) int32

    # Token-type embedding via broadcast select over the tiny resident table.
    # For T == 2 (standard BERT) this is exactly one where; out-of-range ids
    # select the last row (torch would read garbage / error there anyway).
    t = ttbl[num_types - 1:num_types, :]                    # (1, H)
    for k in range(num_types - 2, -1, -1):                  # T-1 selects (1 for T=2)
        t = jnp.where(tt == k, ttbl[k:k + 1, :], t)

    # Sum in input dtype, single promotion to fp32 for LN math.
    x = (w + p + t).astype(jnp.float32)                     # (TS, H)

    # LayerNorm over hidden axis (eps inside rsqrt, matches nn.LayerNorm(1e-12)).
    # Single fused-pass statistics: mean = E[x], var = E[x^2] - E[x]^2.
    inv_h = jnp.float32(1.0 / hidden)
    s1 = jnp.sum(x, axis=-1, keepdims=True)
    s2 = jnp.sum(x * x, axis=-1, keepdims=True)
    mean = s1 * inv_h
    var = jnp.maximum(s2 * inv_h - mean * mean, 0.0)        # guard tiny cancellation
    y = (x - mean) * lax.rsqrt(var + LN_EPS)
    o_ref[0] = (y * g_ref[...] + b_ref[...]).astype(o_ref.dtype)
    # TODO(synk): nn.Dropout is identity at inference; training-mode dropout not emitted.


def bert_embeddings(input_ids, token_type_ids, params, *, block_seq=1024):
    """input_ids, token_type_ids: [B, S] int32. Returns [B, S, H] float32."""
    B, S = input_ids.shape
    word_tbl = params["word_embeddings"]          # (V, H)
    pos_tbl = params["position_embeddings"]       # (P, H)
    type_tbl = params["token_type_embeddings"]    # (T, H)
    gamma = params["ln_gamma"].reshape(1, -1).astype(jnp.float32)   # (1, H)
    beta = params["ln_beta"].reshape(1, -1).astype(jnp.float32)     # (1, H)
    H = word_tbl.shape[1]
    T = type_tbl.shape[0]
    P = pos_tbl.shape[0]
    assert S <= P, "seq_len must not exceed max_position_embeddings"

    # Word-embedding gather hoisted to XLA (bandwidth-bound gather; ids clamped
    # so out-of-range ids cannot fault). Cast keeps the alias dtype == output.
    ids = input_ids.astype(jnp.int32)
    w_gathered = jnp.take(word_tbl, ids, axis=0, mode="clip").astype(jnp.float32)

    TS = min(block_seq, S)                      # row-block size
    n_seq_blocks = pl.cdiv(S, TS)

    tt3 = token_type_ids.astype(jnp.int32).reshape(B, S, 1)

    # Grid: sequence blocks outer (parallel / megacore-shardable), batch inner
    # (arbitrary / sequential) so pos_ref's block index is constant across the
    # inner loop and its DMA is skipped after the first batch element.
    grid_spec = pltpu.PrefetchScalarGridSpec(
        num_scalar_prefetch=0,
        grid=(n_seq_blocks, B),
        in_specs=[
            pl.BlockSpec((1, TS, H), lambda j, b: (b, j, 0)),   # gathered words
            pl.BlockSpec((TS, H), lambda j, b: (j, 0)),         # position rows (reused over b)
            pl.BlockSpec((T, H), lambda j, b: (0, 0)),          # token-type table
            pl.BlockSpec((1, TS, 1), lambda j, b: (b, j, 0)),   # token-type ids
            pl.BlockSpec((1, H), lambda j, b: (0, 0)),          # gamma
            pl.BlockSpec((1, H), lambda j, b: (0, 0)),          # beta
        ],
        out_specs=pl.BlockSpec((1, TS, H), lambda j, b: (b, j, 0)),
    )

    # Explicit VMEM budget: double-buffered word/pos/out streams + small extras,
    # 1.5x headroom, floored at 32 MiB (fits v5e/v6e/v7x physical VMEM for the
    # default TS; keeps TS=1024,H=1024 under v7x's 64 MiB).
    vmem_need = 2 * (3 * TS * H * 4 + TS * 4 + T * H * 4 + 2 * H * 4)
    vmem_limit = max(32 * 1024 * 1024, (vmem_need * 3) // 2)

    out = pl.pallas_call(
        functools.partial(_bert_emb_kernel, num_types=T, hidden=H),
        out_shape=jax.ShapeDtypeStruct((B, S, H), jnp.float32),
        grid_spec=grid_spec,
        input_output_aliases={0: 0},            # output overwrites w_gathered slab
        compiler_params=pltpu.CompilerParams(
            dimension_semantics=("parallel", "arbitrary"),
            vmem_limit_bytes=vmem_limit),
    )(w_gathered, pos_tbl, type_tbl, tt3, gamma, beta)
    return out


def init_params(key, vocab_size, max_position_embeddings, type_vocab_size, hidden_size):
    k1, k2, k3 = jax.random.split(key, 3)
    scale = 0.02
    return {
        "word_embeddings": scale * jax.random.normal(
            k1, (vocab_size, hidden_size), jnp.float32),
        "position_embeddings": scale * jax.random.normal(
            k2, (max_position_embeddings, hidden_size), jnp.float32),
        "token_type_embeddings": scale * jax.random.normal(
            k3, (type_vocab_size, hidden_size), jnp.float32),
        "ln_gamma": jnp.ones((hidden_size,), jnp.float32),
        "ln_beta": jnp.zeros((hidden_size,), jnp.float32),
    }


def _reference(input_ids, token_type_ids, params):
    B, S = input_ids.shape
    w = jnp.take(params["word_embeddings"], input_ids, axis=0)
    p = jnp.take(params["position_embeddings"],
                 jnp.broadcast_to(jnp.arange(S), (B, S)), axis=0)
    t = jnp.take(params["token_type_embeddings"], token_type_ids, axis=0)
    x = w + p + t
    mean = jnp.mean(x, axis=-1, keepdims=True)
    var = jnp.mean((x - mean) ** 2, axis=-1, keepdims=True)
    y = (x - mean) * lax.rsqrt(var + LN_EPS)
    return y * params["ln_gamma"] + params["ln_beta"]


if __name__ == "__main__":
    # Small BERT-like config.
    B, S, H = 2, 8, 128
    VOCAB, MAX_POS, TYPE_VOCAB = 64, 16, 2

    key = jax.random.PRNGKey(0)
    k_params, k_ids, k_tt = jax.random.split(key, 3)

    params = init_params(k_params, VOCAB, MAX_POS, TYPE_VOCAB, H)
    input_ids = jax.random.randint(k_ids, (B, S), 0, VOCAB, dtype=jnp.int32)
    token_type_ids = jax.random.randint(k_tt, (B, S), 0, TYPE_VOCAB, dtype=jnp.int32)

    fn = jax.jit(bert_embeddings)
    out = fn(input_ids, token_type_ids, params)
    out = jax.block_until_ready(out)

    ref = _reference(input_ids, token_type_ids, params)
    assert out.shape == (B, S, H)
    assert jnp.allclose(out, ref, atol=1e-5, rtol=1e-5), "mismatch vs. reference"

    print("KERNEL_OK")
</pallas_src>

<mosaic_0001>
module attributes {stable_mosaic.version = 11 : i64} {
  func.func @_bert_emb_kernel(%arg0: i32, %arg1: i32, %arg2: memref<1x8x128xf32, #tpu.memory_space<vmem>>, %arg3: memref<8x128xf32, #tpu.memory_space<vmem>>, %arg4: memref<2x128xf32, #tpu.memory_space<vmem>>, %arg5: memref<1x8x1xi32, #tpu.memory_space<vmem>>, %arg6: memref<1x128xf32, #tpu.memory_space<vmem>>, %arg7: memref<1x128xf32, #tpu.memory_space<vmem>>, %arg8: memref<1x8x128xf32, #tpu.memory_space<vmem>>) attributes {dimension_semantics = [#tpu.dimension_semantics<parallel>, #tpu.dimension_semantics<arbitrary>], iteration_bounds = array<i64: 1, 2>, scalar_prefetch = 0 : i64, scratch_operands = 0 : i64, tpu.core_type = #tpu.core_type<tc>, window_params = [{transform_indices = @transform_0, window_bounds = array<i64: 1, 8, 128>}, {transform_indices = @transform_1, window_bounds = array<i64: 8, 128>}, {pipeline_mode = #tpu.pipeline_mode<synchronous>, transform_indices = @transform_2, window_bounds = array<i64: 2, 128>}, {transform_indices = @transform_3, window_bounds = array<i64: 1, 8, 1>}, {pipeline_mode = #tpu.pipeline_mode<synchronous>, transform_indices = @transform_4, window_bounds = array<i64: 1, 128>}, {pipeline_mode = #tpu.pipeline_mode<synchronous>, transform_indices = @transform_5, window_bounds = array<i64: 1, 128>}, {transform_indices = @transform_6, window_bounds = array<i64: 1, 8, 128>}]} {
    %c0 = arith.constant 0 : index
    %c0_0 = arith.constant 0 : index
    %c0_1 = arith.constant 0 : index
    %0 = vector.load %arg2[%c0, %c0_0, %c0_1] : memref<1x8x128xf32, #tpu.memory_space<vmem>>, vector<1x8x128xf32>
    %1 = vector.shape_cast %0 : vector<1x8x128xf32> to vector<8x128xf32>
    %c0_2 = arith.constant 0 : index
    %c0_3 = arith.constant 0 : index
    %2 = vector.load %arg3[%c0_2, %c0_3] : memref<8x128xf32, #tpu.memory_space<vmem>>, vector<8x128xf32>
    %c0_4 = arith.constant 0 : index
    %c0_5 = arith.constant 0 : index
    %3 = vector.load %arg4[%c0_4, %c0_5] : memref<2x128xf32, #tpu.memory_space<vmem>>, vector<2x128xf32>
    %c0_6 = arith.constant 0 : index
    %c0_7 = arith.constant 0 : index
    %c0_8 = arith.constant 0 : index
    %4 = vector.load %arg5[%c0_6, %c0_7, %c0_8] : memref<1x8x1xi32, #tpu.memory_space<vmem>>, vector<1x8x1xi32>
    %5 = vector.shape_cast %4 : vector<1x8x1xi32> to vector<8x1xi32>
    %6 = vector.extract_strided_slice %3 {offsets = [1, 0], sizes = [1, 128], strides = [1, 1]} : vector<2x128xf32> to vector<1x128xf32>
    %c0_i32 = arith.constant 0 : i32
    %7 = vector.broadcast %c0_i32 : i32 to vector<8x1xi32>
    %8 = arith.cmpi eq, %5, %7 : vector<8x1xi32>
    %9 = vector.extract_strided_slice %3 {offsets = [0, 0], sizes = [1, 128], strides = [1, 1]} : vector<2x128xf32> to vector<1x128xf32>
    %10 = vector.shape_cast %8 : vector<8x1xi1> to vector<8x1xi1>
    %11 = vector.broadcast %10 : vector<8x1xi1> to vector<8x128xi1>
    %12 = vector.shape_cast %9 : vector<1x128xf32> to vector<1x128xf32>
    %13 = vector.broadcast %12 : vector<1x128xf32> to vector<8x128xf32>
    %14 = vector.shape_cast %6 : vector<1x128xf32> to vector<1x128xf32>
    %15 = vector.broadcast %14 : vector<1x128xf32> to vector<8x128xf32>
    %16 = arith.select %11, %13, %15 : vector<8x128xi1>, vector<8x128xf32>
    %17 = arith.addf %1, %2 : vector<8x128xf32>
    %18 = arith.addf %17, %16 : vector<8x128xf32>
    %cst = arith.constant dense<0.000000e+00> : vector<8xf32>
    %19 = vector.multi_reduction <add>, %18, %cst [1] : vector<8x128xf32> to vector<8xf32>
    %20 = vector.shape_cast %19 : vector<8xf32> to vector<8x1xf32>
    %21 = arith.mulf %18, %18 : vector<8x128xf32>
    %cst_9 = arith.constant dense<0.000000e+00> : vector<8xf32>
    %22 = vector.multi_reduction <add>, %21, %cst_9 [1] : vector<8x128xf32> to vector<8xf32>
    %23 = vector.shape_cast %22 : vector<8xf32> to vector<8x1xf32>
    %cst_10 = arith.constant 7.812500e-03 : f32
    %24 = vector.broadcast %cst_10 : f32 to vector<8x1xf32>
    %25 = arith.mulf %20, %24 : vector<8x1xf32>
    %cst_11 = arith.constant 7.812500e-03 : f32
    %26 = vector.broadcast %cst_11 : f32 to vector<8x1xf32>
    %27 = arith.mulf %23, %26 : vector<8x1xf32>
    %28 = arith.mulf %25, %25 : vector<8x1xf32>
    %29 = arith.subf %27, %28 : vector<8x1xf32>
    %cst_12 = arith.constant 0.000000e+00 : f32
    %30 = vector.broadcast %cst_12 : f32 to vector<8x1xf32>
    %31 = arith.maximumf %29, %30 : vector<8x1xf32>
    %32 = vector.broadcast %25 : vector<8x1xf32> to vector<8x128xf32>
    %33 = arith.subf %18, %32 : vector<8x128xf32>
    %cst_13 = arith.constant 9.99999996E-13 : f32
    %34 = vector.broadcast %cst_13 : f32 to vector<8x1xf32>
    %35 = arith.addf %31, %34 : vector<8x1xf32>
    %36 = math.rsqrt %35 : vector<8x1xf32>
    %37 = vector.broadcast %36 : vector<8x1xf32> to vector<8x128xf32>
    %38 = arith.mulf %33, %37 : vector<8x128xf32>
    %c0_14 = arith.constant 0 : index
    %c0_15 = arith.constant 0 : index
    %39 = vector.load %arg6[%c0_14, %c0_15] : memref<1x128xf32, #tpu.memory_space<vmem>>, vector<1x128xf32>
    %40 = vector.broadcast %39 : vector<1x128xf32> to vector<8x128xf32>
    %41 = arith.mulf %38, %40 : vector<8x128xf32>
    %c0_16 = arith.constant 0 : index
    %c0_17 = arith.constant 0 : index
    %42 = vector.load %arg7[%c0_16, %c0_17] : memref<1x128xf32, #tpu.memory_space<vmem>>, vector<1x128xf32>
    %43 = vector.broadcast %42 : vector<1x128xf32> to vector<8x128xf32>
    %44 = arith.addf %41, %43 : vector<8x128xf32>
    %c0_18 = arith.constant 0 : index
    %c0_19 = arith.constant 0 : index
    %c0_20 = arith.constant 0 : index
    %45 = vector.load %arg8[%c0_18, %c0_19, %c0_20] : memref<1x8x128xf32, #tpu.memory_space<vmem>>, vector<1x8x128xf32>
    %46 = vector.shape_cast %45 : vector<1x8x128xf32> to vector<8x128xf32>
    %47 = vector.shape_cast %44 : vector<8x128xf32> to vector<1x8x128xf32>
    tpu.vector_store %arg8[%c0_18, %c0_19, %c0_20], %47 {strides = array<i32>} : memref<1x8x128xf32, #tpu.memory_space<vmem>>, vector<1x8x128xf32>,
    return
  }
  func.func @transform_0(%arg0: i32, %arg1: i32) -> (i32, i32, i32) {
    %c0_i32 = arith.constant 0 : i32
    %c0_i32_0 = arith.constant 0 : i32
    return %arg1, %arg0, %c0_i32 : i32, i32, i32
  }
  func.func @transform_1(%arg0: i32, %arg1: i32) -> (i32, i32) {
    %c0_i32 = arith.constant 0 : i32
    %c0_i32_0 = arith.constant 0 : i32
    return %arg0, %c0_i32 : i32, i32
  }
  func.func @transform_2(%arg0: i32, %arg1: i32) -> (i32, i32) {
    %c0_i32 = arith.constant 0 : i32
    %c0_i32_0 = arith.constant 0 : i32
    %c0_i32_1 = arith.constant 0 : i32
    return %c0_i32, %c0_i32_0 : i32, i32
  }
  func.func @transform_3(%arg0: i32, %arg1: i32) -> (i32, i32, i32) {
    %c0_i32 = arith.constant 0 : i32
    %c0_i32_0 = arith.constant 0 : i32
    return %arg1, %arg0, %c0_i32 : i32, i32, i32
  }
  func.func @transform_4(%arg0: i32, %arg1: i32) -> (i32, i32) {
    %c0_i32 = arith.constant 0 : i32
    %c0_i32_0 = arith.constant 0 : i32
    %c0_i32_1 = arith.constant 0 : i32
    return %c0_i32, %c0_i32_0 : i32, i32
  }
  func.func @transform_5(%arg0: i32, %arg1: i32) -> (i32, i32) {
    %c0_i32 = arith.constant 0 : i32
    %c0_i32_0 = arith.constant 0 : i32
    %c0_i32_1 = arith.constant 0 : i32
    return %c0_i32, %c0_i32_0 : i32, i32
  }
  func.func @transform_6(%arg0: i32, %arg1: i32) -> (i32, i32, i32) {
    %c0_i32 = arith.constant 0 : i32
    %c0_i32_0 = arith.constant 0 : i32
    return %arg1, %arg0, %c0_i32 : i32, i32, i32
  }
}

</mosaic_0001>

<llo_original>
// kernel: bert_embeddings.1
$region0: #{bert_embeddings.1}
  #allocation0 [shape = 'u32[]', space=smem, size = 0x4, offset = 0x4, fixed_abs, tag = 'smem constant byte address 0x4 - core index']
  #allocation1 [shape = 'u32[144,128]{1,0:T(1,128)}', space=vmem, size = 0x12000, scoped, tag = 'internal scratch']
  %s0 = inlined_call_operand.hbm [shape: f32[2,8,128], index: 0, kind: input, shape index: {}, may-alias: {0,6}]
  %s1 = inlined_call_operand.vmem [shape: f32[16,128], index: 1, kind: input, shape index: {}]
  %s2 = inlined_call_operand.vmem [shape: f32[2,128], index: 2, kind: input, shape index: {}]
  %s3 = inlined_call_operand.vmem [shape: s32[2,8,1], index: 3, kind: input, shape index: {}]
  %s4 = inlined_call_operand.vmem [shape: f32[1,128], index: 4, kind: input, shape index: {}]
  %s5 = inlined_call_operand.vmem [shape: f32[1,128], index: 5, kind: input, shape index: {}]
  %s6 = inlined_call_operand.hbm [shape: f32[2,8,128], index: 6, kind: output, shape index: {}, may-alias: {0,6}]
  %s7 = sld [smem:[#allocation0]]
  $region61: #{bert_embeddings.1} parent=0
    _
  %s9 = ssub.s32 1, %s7
  %s10 = scalar_select 0, %s9, %s7
  $region1: #{bert_embeddings.1} parent=0
    #allocation2 [shape = 'u8[8192]{0}', space=vmem, size = 0x2000, scoped, tag = 'input window, operand 0']
    #allocation3 [shape = 's32[2]{0}', space=sflag, size = 0x8, scoped, tag = 'scoped memory for bert_embeddings.1']
    #allocation4 [shape = 's32[2]{0}', space=sflag, size = 0x8, scoped, tag = 'scoped memory for bert_embeddings.1']
    #allocation5 [shape = 'u8[8192]{0}', space=vmem, size = 0x2000, scoped, tag = 'output window, operand 0']
    %11 = vsyncpa [#allocation3], 0
    %s12 = scalar_lea.sflag [#allocation3], 1
    %13 = vsyncpa %s12, 0
    %14 = vsyncpa [#allocation4], 0
    %s15 = scalar_lea.sflag [#allocation4], 1
    %16 = vsyncpa %s15, 0
    loop: start=0, step=1, limit=4
    $region2: #{bert_embeddings.1} parent=1 // loop_pre_header
      _
    $region3: #{bert_embeddings.1} parent=1 // loop_header
      %s18 = sphi 0, %s22
      %p19 = scmp.ge.s32.totalorder %s18, 4
      %s25 = sphi 0, %s37
      %s26 = sphi 0, %s33
      %s27 = sphi 0, %s25
      %s28 = sphi 0, %s26
      %s29 = sphi 0, %s27
      %s30 = sphi 0, %s28
      %s42 = sphi 0, %s44
      %s45 = sphi 0, %s42
      %s46 = sphi 0, %s45
      %s62 = sphi 0, %s46
      %s68 = sphi 0, %s70
      %s71 = sphi 0, %s68
      %s72 = sphi 0, %s71
      %s88 = sphi 0, %s72
      %s92 = sphi 0, %s92
      %s94 = sphi 0, %s92
      %s95 = sphi 0, %s94
      %s109 = sphi 0, %s95
      %s117 = sphi 0, %s119
      %s120 = sphi 0, %s117
      %s121 = sphi 0, %s120
      %s137 = sphi 0, %s121
      %s141 = sphi 0, %s141
      %s143 = sphi 0, %s141
      %s144 = sphi 0, %s143
      %s158 = sphi 0, %s144
      %s162 = sphi 0, %s162
      %s164 = sphi 0, %s162
      %s165 = sphi 0, %s164
      %s179 = sphi 0, %s165
      %s187 = sphi 0, %s189
      %s190 = sphi 0, %s187
      %s191 = sphi 0, %s190
      %s207 = sphi 0, %s191
    $region4: #{bert_embeddings.1} parent=1 // loop_header_branch
      %21 = sbr.rel (%p19) target = $region8
    $region5: #{bert_embeddings.1} parent=1 // loop_body
      %s23 = ssub.s32 %s18, 1
      %s24 = ssub.s32 %s18, 2
      %s31 = sadd.s32 1, %s26
      %p32 = scmp.ge.s32.totalorder %s31, 2
      %s33 = scalar_select %p32, 0, %s31
      %s34 = sadd.s32 1, %s25
      %s35 = scalar_select %p32, %s34, %s25
      %p36 = scmp.ge.s32.totalorder %s35, 1
      %s37 = scalar_select %p36, 0, %s35
      %s38 = ssub.s32 %s26, %s33
      %s39 = ssub.s32 %s25, %s37
      %s40 = sor.u32 %s38, %s39
      %p41 = scmp.eq.s32.totalorder %s40, 0
      %s43 = sadd.s32 %s42, 1
      %s44 = scalar_select %p41, %s42, %s43
      %p47 = pneg %p41
      %p48 = scmp.eq.s32.totalorder %s18, 1
      %p49 = por %p47, %p48
      %p50 = scmp.ne.s32.totalorder %s42, %s45
      %p51 = scmp.eq.s32.totalorder %s18, 0
      %p52 = por %p50, %p51
      %p53 = scmp.ne.s32.totalorder %s42, %s45
      %p54 = scmp.eq.s32.totalorder %s23, 1
      %p55 = por %p53, %p54
      %p56 = scmp.ne.s32.totalorder %s45, %s46
      %p57 = scmp.eq.s32.totalorder %s23, 0
      %p58 = por %p56, %p57
      %p59 = scmp.ne.s32.totalorder %s45, %s46
      %p60 = scmp.eq.s32.totalorder %s24, 1
      %p61 = por %p59, %p60
      %p63 = scmp.ne.s32.totalorder %s46, %s62
      %p64 = scmp.eq.s32.totalorder %s24, 0
      %p65 = por %p63, %p64
      %s66 = ssub.s32 %s25, %s37
      %p67 = scmp.eq.s32.totalorder %s66, 0
      %s69 = sadd.s32 %s68, 1
      %s70 = scalar_select %p67, %s68, %s69
      %p73 = pneg %p67
      %p74 = scmp.eq.s32.totalorder %s18, 1
      %p75 = por %p73, %p74
      %p76 = scmp.ne.s32.totalorder %s68, %s71
      %p77 = scmp.eq.s32.totalorder %s18, 0
      %p78 = por %p76, %p77
      %p79 = scmp.ne.s32.totalorder %s68, %s71
      %p80 = scmp.eq.s32.totalorder %s23, 1
      %p81 = por %p79, %p80
      %p82 = scmp.ne.s32.totalorder %s71, %s72
      %p83 = scmp.eq.s32.totalorder %s23, 0
      %p84 = por %p82, %p83
      %p85 = scmp.ne.s32.totalorder %s71, %s72
      %p86 = scmp.eq.s32.totalorder %s24, 1
      %p87 = por %p85, %p86
      %p89 = scmp.ne.s32.totalorder %s72, %s88
      %p90 = scmp.eq.s32.totalorder %s24, 0
      %p91 = por %p89, %p90
      %s93 = sadd.s32 %s92, 1
      %p96 = scmp.eq.s32.totalorder %s18, 1
      %p97 = scmp.ne.s32.totalorder %s92, %s94
      %p98 = scmp.eq.s32.totalorder %s18, 0
      %p99 = por %p97, %p98
      %p100 = scmp.ne.s32.totalorder %s92, %s94
      %p101 = scmp.eq.s32.totalorder %s23, 1
      %p102 = por %p100, %p101
      %p103 = scmp.ne.s32.totalorder %s94, %s95
      %p104 = scmp.eq.s32.totalorder %s23, 0
      %p105 = por %p103, %p104
      %p106 = scmp.ne.s32.totalorder %s94, %s95
      %p107 = scmp.eq.s32.totalorder %s24, 1
      %p108 = por %p106, %p107
      %p110 = scmp.ne.s32.totalorder %s95, %s109
      %p111 = scmp.eq.s32.totalorder %s24, 0
      %p112 = por %p110, %p111
      %s113 = ssub.s32 %s26, %s33
      %s114 = ssub.s32 %s25, %s37
      %s115 = sor.u32 %s113, %s114
      %p116 = scmp.eq.s32.totalorder %s115, 0
      %s118 = sadd.s32 %s117, 1
      %s119 = scalar_select %p116, %s117, %s118
      %p122 = pneg %p116
      %p123 = scmp.eq.s32.totalorder %s18, 1
      %p124 = por %p122, %p123
      %p125 = scmp.ne.s32.totalorder %s117, %s120
      %p126 = scmp.eq.s32.totalorder %s18, 0
      %p127 = por %p125, %p126
      %p128 = scmp.ne.s32.totalorder %s117, %s120
      %p129 = scmp.eq.s32.totalorder %s23, 1
      %p130 = por %p128, %p129
      %p131 = scmp.ne.s32.totalorder %s120, %s121
      %p132 = scmp.eq.s32.totalorder %s23, 0
      %p133 = por %p131, %p132
      %p134 = scmp.ne.s32.totalorder %s120, %s121
      %p135 = scmp.eq.s32.totalorder %s24, 1
      %p136 = por %p134, %p135
      %p138 = scmp.ne.s32.totalorder %s121, %s137
      %p139 = scmp.eq.s32.totalorder %s24, 0
      %p140 = por %p138, %p139
      %s142 = sadd.s32 %s141, 1
      %p145 = scmp.eq.s32.totalorder %s18, 1
      %p146 = scmp.ne.s32.totalorder %s141, %s143
      %p147 = scmp.eq.s32.totalorder %s18, 0
      %p148 = por %p146, %p147
      %p149 = scmp.ne.s32.totalorder %s141, %s143
      %p150 = scmp.eq.s32.totalorder %s23, 1
      %p151 = por %p149, %p150
      %p152 = scmp.ne.s32.totalorder %s143, %s144
      %p153 = scmp.eq.s32.totalorder %s23, 0
      %p154 = por %p152, %p153
      %p155 = scmp.ne.s32.totalorder %s143, %s144
      %p156 = scmp.eq.s32.totalorder %s24, 1
      %p157 = por %p155, %p156
      %p159 = scmp.ne.s32.totalorder %s144, %s158
      %p160 = scmp.eq.s32.totalorder %s24, 0
      %p161 = por %p159, %p160
      %s163 = sadd.s32 %s162, 1
      %p166 = scmp.eq.s32.totalorder %s18, 1
      %p167 = scmp.ne.s32.totalorder %s162, %s164
      %p168 = scmp.eq.s32.totalorder %s18, 0
      %p169 = por %p167, %p168
      %p170 = scmp.ne.s32.totalorder %s162, %s164
      %p171 = scmp.eq.s32.totalorder %s23, 1
      %p172 = por %p170, %p171
      %p173 = scmp.ne.s32.totalorder %s164, %s165
      %p174 = scmp.eq.s32.totalorder %s23, 0
      %p175 = por %p173, %p174
      %p176 = scmp.ne.s32.totalorder %s164, %s165
      %p177 = scmp.eq.s32.totalorder %s24, 1
      %p178 = por %p176, %p177
      %p180 = scmp.ne.s32.totalorder %s165, %s179
      %p181 = scmp.eq.s32.totalorder %s24, 0
      %p182 = por %p180, %p181
      %s183 = ssub.s32 %s26, %s33
      %s184 = ssub.s32 %s25, %s37
      %s185 = sor.u32 %s183, %s184
      %p186 = scmp.eq.s32.totalorder %s185, 0
      %s188 = sadd.s32 %s187, 1
      %s189 = scalar_select %p186, %s187, %s188
      %p192 = pneg %p186
      %p193 = scmp.eq.s32.totalorder %s18, 1
      %p194 = por %p192, %p193
      %p195 = scmp.ne.s32.totalorder %s187, %s190
      %p196 = scmp.eq.s32.totalorder %s18, 0
      %p197 = por %p195, %p196
      %p198 = scmp.ne.s32.totalorder %s187, %s190
      %p199 = scmp.eq.s32.totalorder %s23, 1
      %p200 = por %p198, %p199
      %p201 = scmp.ne.s32.totalorder %s190, %s191
      %p202 = scmp.eq.s32.totalorder %s23, 0
      %p203 = por %p201, %p202
      %p204 = scmp.ne.s32.totalorder %s190, %s191
      %p205 = scmp.eq.s32.totalorder %s24, 1
      %p206 = por %p204, %p205
      %p208 = scmp.ne.s32.totalorder %s191, %s207
      %p209 = scmp.eq.s32.totalorder %s24, 0
      %p210 = por %p208, %p209
      %p211 = scmp.le.s32.totalorder 1, %s18
      %p212 = scmp.lt.s32.totalorder %s18, 3
      %p213 = pnand %p211, %p212
      %p214 = pneg %p213
      // Predicated region
      $region9: #{bert_embeddings.1} parent=5 // pred_check
        _
      $region10: #{bert_embeddings.1} parent=5 // pred_check_branch
        %216 = sbr.rel (%p213) target = $region12
      $region11: #{bert_embeddings.1} parent=5 // pred_region
        %s217 = ssub.s32 %s18, 1
        // Predicated region
        $region13: #{bert_embeddings.1} parent=11 // pred_check
          %p218 = pneg %p84
        $region14: #{bert_embeddings.1} parent=11 // pred_check_branch
          %220 = sbr.rel (%p218) target = $region16
        $region15: #{bert_embeddings.1} parent=11 // pred_region
          %p221 = scmp.lt.s32.totalorder %s27, 1
          %s222 = scalar_select %p221, %s27, 1
          %s223 = smul.addr %s222, 8
          %s224 = scalar_lea.vmem %s1, %s223
        $region16: #{bert_embeddings.1} parent=11 // pred_fallthru
          _
        // Predicated region
        $region17: #{bert_embeddings.1} parent=11 // pred_check
          %p225 = pneg %p105
        $region18: #{bert_embeddings.1} parent=11 // pred_check_branch
          %227 = sbr.rel (%p225) target = $region20
        $region19: #{bert_embeddings.1} parent=11 // pred_region
          _
        $region20: #{bert_embeddings.1} parent=11 // pred_fallthru
          _
        // Predicated region
        $region21: #{bert_embeddings.1} parent=11 // pred_check
          %p228 = pneg %p154
        $region22: #{bert_embeddings.1} parent=11 // pred_check_branch
          %230 = sbr.rel (%p228) target = $region24
        $region23: #{bert_embeddings.1} parent=11 // pred_region
          _
        $region24: #{bert_embeddings.1} parent=11 // pred_fallthru
          _
        // Predicated region
        $region25: #{bert_embeddings.1} parent=11 // pred_check
          %p231 = pneg %p175
        $region26: #{bert_embeddings.1} parent=11 // pred_check_branch
          %233 = sbr.rel (%p231) target = $region28
        $region27: #{bert_embeddings.1} parent=11 // pred_region
          _
        $region28: #{bert_embeddings.1} parent=11 // pred_fallthru
          _
      $region12: #{bert_embeddings.1} parent=5 // pred_fallthru
        _
      %p234 = scmp.lt.s32.totalorder %s18, 2
      // Predicated region
      $region29: #{bert_embeddings.1} parent=5 // pred_check
        %p235 = pneg %p234
      $region30: #{bert_embeddings.1} parent=5 // pred_check_branch
        %237 = sbr.rel (%p235) target = $region32
      $region31: #{bert_embeddings.1} parent=5 // pred_region
        // Predicated region
        $region33: #{bert_embeddings.1} parent=31 // pred_check
          %p238 = pneg %p52
        $region34: #{bert_embeddings.1} parent=31 // pred_check_branch
          %240 = sbr.rel (%p238) target = $region36
        $region35: #{bert_embeddings.1} parent=31 // pred_region
          %s241 = sand.u32 %s42, 1
          %s242 = scalar_lea.sflag [#allocation3], %s241
          %s243 = sand.u32 %s42, 1
          %s244 = smul.addr %s243, 8
          %s245 = scalar_lea.vmem [#allocation2], %s244
          %s247 = ssub.s32 128, 128
          %248 = vsyncadd %s242, %s247
          %s249 = sadd.s32 %s25, %s26
          %s250 = smul.addr %s249, 128
          %s251 = scalar_lea.hbm %s0, %s250
          %s253 = sshll.u32 %s245, 4
          %s254 = int_to_ptr.vmem [resolvable:$true] %s253
          %256 = dma.hbm_to_vmem [thread:$0]  %s251, 128, %s254, %s242
        $region36: #{bert_embeddings.1} parent=31 // pred_fallthru
          _
        // Predicated region
        $region37: #{bert_embeddings.1} parent=31 // pred_check
          %p257 = pneg %p127
        $region38: #{bert_embeddings.1} parent=31 // pred_check_branch
          %259 = sbr.rel (%p257) target = $region40
        $region39: #{bert_embeddings.1} parent=31 // pred_region
          %p260 = scmp.lt.s32.totalorder %s26, 1
          %s261 = scalar_select %p260, %s26, 1
          %p262 = scmp.lt.s32.totalorder %s25, 0
          %s263 = scalar_select %p262, %s25, 0
          %s264 = sadd.s32 %s263, %s261
          %s265 = smul.addr %s264, 8
          %s266 = scalar_lea.vmem %s3, %s265
        $region40: #{bert_embeddings.1} parent=31 // pred_fallthru
          _
      $region32: #{bert_embeddings.1} parent=5 // pred_fallthru
        _
      %p267 = scmp.le.s32.totalorder 1, %s18
      %p268 = scmp.lt.s32.totalorder %s18, 3
      %p269 = pnand %p267, %p268
      %p270 = pneg %p269
      // Predicated region
      $region41: #{bert_embeddings.1} parent=5 // pred_check
        _
      $region42: #{bert_embeddings.1} parent=5 // pred_check_branch
        %272 = sbr.rel (%p269) target = $region44
      $region43: #{bert_embeddings.1} parent=5 // pred_region
        %s273 = ssub.s32 %s18, 1
        %s274 = sand.u32 %s45, 1
        %s275 = scalar_lea.sflag [#allocation3], %s274
        %s276 = sand.u32 %s45, 1
        %s277 = smul.addr %s276, 8
        %s278 = scalar_lea.vmem [#allocation2], %s277
        // Predicated region
        $region45: #{bert_embeddings.1} parent=43 // pred_check
          %p279 = pneg %p58
        $region46: #{bert_embeddings.1} parent=43 // pred_check_branch
          %281 = sbr.rel (%p279) target = $region48
        $region47: #{bert_embeddings.1} parent=43 // pred_region
          %282 = dma.done %s275, 128
        $region48: #{bert_embeddings.1} parent=43 // pred_fallthru
          _
        %s283 = sand.u32 %s45, 1
        %s284 = scalar_lea.sflag [#allocation3], %s283
        %s285 = sand.u32 %s45, 1
        %s286 = smul.addr %s285, 8
        %s287 = scalar_lea.vmem [#allocation2], %s286
        %p288 = pneg %p58
        %p289 = pneg %p55
        %p290 = scmp.lt.s32.totalorder %s27, 1
        %s291 = scalar_select %p290, %s27, 1
        %s292 = smul.addr %s291, 8
        %s293 = scalar_lea.vmem %s1, %s292
        %p294 = pneg %p84
        %p295 = pneg %p81
        %p296 = pneg %p105
        %p297 = pneg %p102
        %p298 = scmp.lt.s32.totalorder %s28, 1
        %s299 = scalar_select %p298, %s28, 1
        %p300 = scmp.lt.s32.totalorder %s27, 0
        %s301 = scalar_select %p300, %s27, 0
        %s302 = sadd.s32 %s301, %s299
        %s303 = smul.addr %s302, 8
        %s304 = scalar_lea.vmem %s3, %s303
        %p305 = pneg %p133
        %p306 = pneg %p130
        %p307 = pneg %p154
        %p308 = pneg %p151
        %p309 = pneg %p175
        %p310 = pneg %p172
        %p311 = pneg %p203
        %p312 = pneg %p200
        %s313 = sand.u32 %s190, 1
        %s314 = scalar_lea.sflag [#allocation4], %s313
        %s315 = sand.u32 %s190, 1
        %s316 = smul.addr %s315, 8
        %s317 = scalar_lea.vmem [#allocation5], %s316
        %p318 = scmp.lt.s32.totalorder %s27, 1
        %s319 = scalar_select %p318, %s27, 1
        %s320 = smul.addr %s319, 8
        %s321 = scalar_lea.vmem %s1, %s320
        %p322 = scmp.lt.s32.totalorder %s28, 1
        %s323 = scalar_select %p322, %s28, 1
        %p324 = scmp.lt.s32.totalorder %s27, 0
        %s325 = scalar_select %p324, %s27, 0
        %s326 = sadd.s32 %s325, %s323
        %s327 = smul.addr %s326, 8
        %s328 = scalar_lea.vmem %s3, %s327
        %v329 = vld [vmem:[%s278] sm:$0xff]
        %v330 = vld [vmem:[%s321] sm:$0xff]
        %v331 = vld [vmem:[%s2] sm:$0x3]
        %v332 = vld [vmem:[%s328] sm:$0xff]
        %vm333 = vcmp.eq.s32.totalorder %v332, 0
        %v334 = vsel %vm333, 1, 0
        %335 = vset.pattern.permute.xlu0 0
        %336 = vperm.xlu0 %335, %v334
        %v337 = vpop.permute.xlu0 %336
        %vm338 = vcmp.eq.s32.totalorder %v337, 1
        %v339 = vlaneseq
        %v340 = vshrl.u32 %v339, 7
        %v341 = vsub.s32 0, %v340
        %v342 = vrot.slane %v331, %v341
        %v343 = vlaneseq
        %v344 = vshrl.u32 %v343, 7
        %v345 = vsub.s32 1, %v344
        %v346 = vrot.slane %v331, %v345
        %v347 = vsel %vm338, %v342, %v346
        %v348 = vadd.f32 %v329, %v330
        %v349 = vadd.f32 %v348, %v347
        %350 = vadd.xlane.f32.xlu0 %v349
        %v351 = vpop.xlane.xlu0 %350
        %v352 = vmul.f32 %v349, %v349
        %353 = vadd.xlane.f32.xlu0 %v352
        %v354 = vpop.xlane.xlu0 %353
        %v355 = vmul.f32 %v351, 0.0078125
        %v356 = vmul.f32 %v354, 0.0078125
        %v357 = vmul.f32 %v355, %v355
        %v358 = vsub.f32 %v356, %v357
        %v359 = vmax.f32 %v358, 0.0
        %v360 = vsub.f32 %v349, %v355
        %v361 = vadd.f32 %v359, 1e-12
        %v362 = vrsqrt.pop %v361
        %v363 = vmul.f32 %v360, %v362
        %v364 = vld [vmem:[%s4] sm:$0x1]
        %v366 = vlaneseq
        %v367 = vshrl.u32 %v366, 7
        %v368 = vsub.s32 0, %v367
        %v369 = vrot.slane %v364, %v368
        %v371 = vmul.f32 %v363, %v369
        %v372 = vld [vmem:[%s5] sm:$0x1]
        %v374 = vlaneseq
        %v375 = vshrl.u32 %v374, 7
        %v376 = vsub.s32 0, %v375
        %v377 = vrot.slane %v372, %v376
        %v379 = vadd.f32 %v371, %v377
        %380 = vst [vmem:[%s317] sm:$0xff] %v379
        %s381 = sand.u32 %s190, 1
        %s382 = scalar_lea.sflag [#allocation4], %s381
        %s383 = sand.u32 %s190, 1
        %s384 = smul.addr %s383, 8
        %s385 = scalar_lea.vmem [#allocation5], %s384
        // Predicated region
        $region49: #{bert_embeddings.1} parent=43 // pred_check
          %p386 = pneg %p200
        $region50: #{bert_embeddings.1} parent=43 // pred_check_branch
          %388 = sbr.rel (%p386) target = $region52
        $region51: #{bert_embeddings.1} parent=43 // pred_region
          %s390 = ssub.s32 128, 128
          %391 = vsyncadd %s382, %s390
          %s392 = sadd.s32 %s27, %s28
          %s393 = smul.addr %s392, 128
          %s394 = scalar_lea.hbm %s6, %s393
          %s396 = sshll.u32 %s385, 4
          %s397 = int_to_ptr.vmem [resolvable:$true] %s396
          %399 = dma.vmem_to_hbm [thread:$0]  %s397, 128, %s394, %s382
        $region52: #{bert_embeddings.1} parent=43 // pred_fallthru
          _
      $region44: #{bert_embeddings.1} parent=5 // pred_fallthru
        _
      %p400 = scmp.le.s32.totalorder 2, %s18
      // Predicated region
      $region53: #{bert_embeddings.1} parent=5 // pred_check
        %p401 = pneg %p400
      $region54: #{bert_embeddings.1} parent=5 // pred_check_branch
        %403 = sbr.rel (%p401) target = $region56
      $region55: #{bert_embeddings.1} parent=5 // pred_region
        %s404 = ssub.s32 %s18, 2
        // Predicated region
        $region57: #{bert_embeddings.1} parent=55 // pred_check
          %p405 = pneg %p206
        $region58: #{bert_embeddings.1} parent=55 // pred_check_branch
          %407 = sbr.rel (%p405) target = $region60
        $region59: #{bert_embeddings.1} parent=55 // pred_region
          %s408 = sand.u32 %s191, 1
          %s409 = scalar_lea.sflag [#allocation4], %s408
          %s410 = sand.u32 %s191, 1
          %s411 = smul.addr %s410, 8
          %s412 = scalar_lea.vmem [#allocation5], %s411
          %413 = dma.done %s409, 128
        $region60: #{bert_embeddings.1} parent=55 // pred_fallthru
          _
      $region56: #{bert_embeddings.1} parent=5 // pred_fallthru
        _
    $region6: #{bert_embeddings.1} parent=1 // loop_footer
      %s22 = sadd.s32 1, %s18
    $region7: #{bert_embeddings.1} parent=1 // loop_footer_branch
      %17 = sbr.rel target = $region3
    $region8: #{bert_embeddings.1} parent=1 // loop_exit
      _
    %414 = vsyncpa [#allocation3], 1
    %s415 = scalar_lea.sflag [#allocation3], 1
    %416 = vsyncpa %s415, 1
    %417 = vsyncpa [#allocation4], 1
    %s418 = scalar_lea.sflag [#allocation4], 1
    %419 = vsyncpa %s418, 1

</llo_original>
